<compile_context>
chip_gen: v5e
topology: v5e:2x2
jax: 0.10.0
libtpu: 0.0.40
codegen_flags: <defaults>
</compile_context>

<pallas_src>
import jax
import jax.numpy as jnp
from jax.experimental import pallas as pl
from jax.experimental.pallas import tpu as pltpu


def _euclid_sigmoid_kernel(first_ref, second_ref, out_ref):
    # first_ref / second_ref : (tm, W) tiles in VMEM, W = g*H (lane-packed)
    # out_ref                : (tm, g) tile in VMEM
    a = first_ref[...].astype(jnp.float32)
    b = second_ref[...].astype(jnp.float32)
    d = a - b
    dsq = d * d                                   # (tm, W) on the VPU

    w = dsq.shape[-1]
    g = out_ref.shape[-1]
    h = w // g

    # Segmented-ones matrix: seg[i, j] = 1 iff lane i belongs to segment j.
    # Built with compares/mults only (no int division) -> plain VPU ops.
    row_id = jax.lax.broadcasted_iota(jnp.int32, (w, g), 0)
    col_id = jax.lax.broadcasted_iota(jnp.int32, (w, g), 1)
    seg = ((row_id >= col_id * h) & (row_id < (col_id + 1) * h)).astype(jnp.float32)

    # Segmented sum of squares on the (otherwise idle) MXU; keeps the XLU free.
    ssq = jnp.dot(dsq, seg, preferred_element_type=jnp.float32)   # (tm, g)
    dist = jnp.sqrt(ssq)

    # sigmoid(x) = 0.5 * (tanh(x/2) + 1): single EUP op, exact formulation.
    out_ref[...] = (0.5 * jnp.tanh(0.5 * dist) + 0.5).astype(out_ref.dtype)


_LANE = 128                       # lane width / packing target
_PER_BUFFER_BYTES = 4 << 20       # ~4 MiB streaming blocks per input buffer


def euclidian_instruction_trace_difference(first, second):
    """first, second: (..., H) arrays -> (...,) sigmoid(euclidean distance over last dim)."""
    assert first.shape == second.shape
    *lead, H = first.shape
    out_dtype = first.dtype

    N = 1
    for dim in lead:
        N *= dim

    itemsize = jnp.dtype(first.dtype).itemsize

    # Lane packing for narrow H: g rows per packed row (free row-major reshape).
    g = 1
    if H < _LANE and _LANE % H == 0 and N % (_LANE // H) == 0:
        g = _LANE // H
    W = g * H
    rows = N // g

    f2 = first.reshape(rows, W)
    s2 = second.reshape(rows, W)

    # Row-tile sizing with lane-padding-corrected VMEM cost.
    padded_w = pl.cdiv(W, _LANE) * _LANE
    row_bytes = padded_w * itemsize
    tm = max(8, (_PER_BUFFER_BYTES // row_bytes) // 8 * 8)
    # Keep >= 4 grid steps when there is enough work, so megacore / 2-TC
    # sharding of the "parallel" axis has something to split.
    tm = min(tm, max(8, pl.cdiv(pl.cdiv(rows, 4), 8) * 8))
    if tm >= rows:
        tm = rows                     # single full-extent block (always legal)
    num_blocks = pl.cdiv(rows, tm)
    # TODO(synk): add an H-chunking "arbitrary" grid axis with an f32
    # accumulator for extremely large H (> ~100K f32), where even an 8-row
    # block would exceed the per-buffer budget.

    # VMEM footprint: 2 inputs x 2 double-buffers + 2 output buffers, with the
    # output lane-padded to 128 as well.
    out_row_bytes = _LANE * jnp.dtype(out_dtype).itemsize
    footprint = 4 * tm * row_bytes + 2 * tm * out_row_bytes
    vmem_limit = int(min(max(footprint + (8 << 20), 32 << 20), 56 << 20))

    out2 = pl.pallas_call(
        _euclid_sigmoid_kernel,
        out_shape=jax.ShapeDtypeStruct((rows, g), out_dtype),
        grid_spec=pltpu.PrefetchScalarGridSpec(
            num_scalar_prefetch=0,
            grid=(num_blocks,),
            in_specs=[
                pl.BlockSpec((tm, W), lambda i: (i, 0)),
                pl.BlockSpec((tm, W), lambda i: (i, 0)),
            ],
            out_specs=pl.BlockSpec((tm, g), lambda i: (i, 0)),
        ),
        compiler_params=pltpu.CompilerParams(
            dimension_semantics=("parallel",),
            vmem_limit_bytes=vmem_limit,
        ),
    )(f2, s2)

    # rows * g == N exactly (no padding anywhere); row-major order matches.
    return out2.reshape(N).reshape(tuple(lead))


if __name__ == "__main__":
    # Small shapes implied by the module: (batch, seq, hidden) embedding traces.
    B, S, H = 2, 8, 32
    key = jax.random.PRNGKey(0)
    k1, k2 = jax.random.split(key)
    first = jax.random.normal(k1, (B, S, H), dtype=jnp.float32)
    second = jax.random.normal(k2, (B, S, H), dtype=jnp.float32)

    out = euclidian_instruction_trace_difference(first, second)
    out = jax.block_until_ready(out)

    # Pure-JAX reference check.
    ref = jax.nn.sigmoid(jnp.sqrt(jnp.sum((first - second) ** 2, axis=-1)))
    assert out.shape == (B, S)
    assert jnp.allclose(out, ref, atol=1e-3, rtol=1e-3), float(jnp.max(jnp.abs(out - ref)))

    print("KERNEL_OK")
</pallas_src>

<mosaic_0001>
module attributes {stable_mosaic.version = 11 : i64} {
  func.func @_euclid_sigmoid_kernel(%arg0: i32, %arg1: memref<4x128xf32, #tpu.memory_space<vmem>>, %arg2: memref<4x128xf32, #tpu.memory_space<vmem>>, %arg3: memref<4x4xf32, #tpu.memory_space<vmem>>) attributes {dimension_semantics = [#tpu.dimension_semantics<parallel>], iteration_bounds = array<i64: 1>, scalar_prefetch = 0 : i64, scratch_operands = 0 : i64, tpu.core_type = #tpu.core_type<tc>, window_params = [{transform_indices = @transform_0, window_bounds = array<i64: 4, 128>}, {transform_indices = @transform_1, window_bounds = array<i64: 4, 128>}, {transform_indices = @transform_2, window_bounds = array<i64: 4, 4>}]} {
    %c0 = arith.constant 0 : index
    %c0_0 = arith.constant 0 : index
    %0 = vector.load %arg1[%c0, %c0_0] : memref<4x128xf32, #tpu.memory_space<vmem>>, vector<4x128xf32>
    %c0_1 = arith.constant 0 : index
    %c0_2 = arith.constant 0 : index
    %1 = vector.load %arg2[%c0_1, %c0_2] : memref<4x128xf32, #tpu.memory_space<vmem>>, vector<4x128xf32>
    %2 = arith.subf %0, %1 : vector<4x128xf32>
    %3 = arith.mulf %2, %2 : vector<4x128xf32>
    %4 = tpu.iota {dimensions = array<i32: 0>} : vector<128x4xi32>
    %5 = tpu.iota {dimensions = array<i32: 1>} : vector<128x4xi32>
    %c32_i32 = arith.constant 32 : i32
    %6 = vector.broadcast %c32_i32 : i32 to vector<128x4xi32>
    %7 = arith.muli %5, %6 : vector<128x4xi32>
    %8 = arith.cmpi sge, %4, %7 : vector<128x4xi32>
    %c1_i32 = arith.constant 1 : i32
    %9 = vector.broadcast %c1_i32 : i32 to vector<128x4xi32>
    %10 = arith.addi %5, %9 : vector<128x4xi32>
    %c32_i32_3 = arith.constant 32 : i32
    %11 = vector.broadcast %c32_i32_3 : i32 to vector<128x4xi32>
    %12 = arith.muli %10, %11 : vector<128x4xi32>
    %13 = arith.cmpi slt, %4, %12 : vector<128x4xi32>
    %14 = arith.andi %8, %13 : vector<128x4xi1>
    %15 = arith.extui %14 : vector<128x4xi1> to vector<128x4xi32>
    %16 = arith.sitofp %15 : vector<128x4xi32> to vector<128x4xf32>
    %cst = arith.constant dense<0.000000e+00> : vector<4x4xf32>
    %17 = tpu.matmul %3, %16, %cst {dimension_numbers = #tpu.dot_dimension_numbers<[1], [0], [0], [1], [0, 0, 1, 1], [], []>} : vector<4x128xf32>, vector<128x4xf32>, vector<4x4xf32> -> vector<4x4xf32>
    %18 = math.sqrt %17 : vector<4x4xf32>
    %cst_4 = arith.constant 5.000000e-01 : f32
    %19 = vector.broadcast %cst_4 : f32 to vector<4x4xf32>
    %20 = arith.mulf %19, %18 : vector<4x4xf32>
    %21 = math.tanh %20 : vector<4x4xf32>
    %cst_5 = arith.constant 5.000000e-01 : f32
    %22 = vector.broadcast %cst_5 : f32 to vector<4x4xf32>
    %23 = arith.mulf %22, %21 : vector<4x4xf32>
    %cst_6 = arith.constant 5.000000e-01 : f32
    %24 = vector.broadcast %cst_6 : f32 to vector<4x4xf32>
    %25 = arith.addf %23, %24 : vector<4x4xf32>
    %c0_7 = arith.constant 0 : index
    %c0_8 = arith.constant 0 : index
    %26 = vector.load %arg3[%c0_7, %c0_8] : memref<4x4xf32, #tpu.memory_space<vmem>>, vector<4x4xf32>
    tpu.vector_store %arg3[%c0_7, %c0_8], %25 {strides = array<i32>} : memref<4x4xf32, #tpu.memory_space<vmem>>, vector<4x4xf32>,
    return
  }
  func.func @transform_0(%arg0: i32) -> (i32, i32) {
    %c0_i32 = arith.constant 0 : i32
    %c0_i32_0 = arith.constant 0 : i32
    return %arg0, %c0_i32 : i32, i32
  }
  func.func @transform_1(%arg0: i32) -> (i32, i32) {
    %c0_i32 = arith.constant 0 : i32
    %c0_i32_0 = arith.constant 0 : i32
    return %arg0, %c0_i32 : i32, i32
  }
  func.func @transform_2(%arg0: i32) -> (i32, i32) {
    %c0_i32 = arith.constant 0 : i32
    %c0_i32_0 = arith.constant 0 : i32
    return %arg0, %c0_i32 : i32, i32
  }
}

</mosaic_0001>

<llo_original>
// kernel: tpu_custom_call.1
$region0: #{tpu_custom_call.1}
  #allocation0 [shape = 'u32[]', space=smem, size = 0x4, offset = 0x4, fixed_abs, tag = 'smem constant byte address 0x4 - core index']
  #allocation1 [shape = 'u32[72,128]{1,0:T(1,128)}', space=vmem, size = 0x9000, scoped, tag = 'internal scratch']
  %s0 = inlined_call_operand.hbm [shape: f32[4,128], index: 0, kind: input, shape index: {}]
  %s1 = inlined_call_operand.hbm [shape: f32[4,128], index: 1, kind: input, shape index: {}]
  %s2 = inlined_call_operand.hbm [shape: f32[4,4], index: 2, kind: output, shape index: {}]
  %s3 = sld [smem:[#allocation0]]
  $region26: #{tpu_custom_call.1} parent=0
    _
  %s5 = ssub.s32 1, %s3
  %s6 = scalar_select 0, %s5, %s3
  $region1: #{tpu_custom_call.1} parent=0
    #allocation2 [shape = 'u8[2048]{0}', space=vmem, size = 0x800, scoped, tag = 'input window, operand 0, single buffered']
    #allocation3 [shape = 's32[1]{0}', space=sflag, size = 0x4, scoped, tag = 'scoped memory for tpu_custom_call.1']
    #allocation4 [shape = 's32[1]{0}', space=sflag, size = 0x4, scoped, tag = 'scoped memory for tpu_custom_call.1']
    #allocation5 [shape = 'u8[2048]{0}', space=vmem, size = 0x800, scoped, tag = 'input window, operand 1, single buffered']
    #allocation6 [shape = 's32[1]{0}', space=sflag, size = 0x4, scoped, tag = 'scoped memory for tpu_custom_call.1']
    #allocation7 [shape = 'u8[2048]{0}', space=vmem, size = 0x800, scoped, tag = 'output window, operand 0, single buffered']
    %7 = vsyncpa [#allocation3], 0
    %8 = vsyncpa [#allocation6], 0
    %9 = vsyncpa [#allocation4], 0
    // Predicated region
    $region2: #{tpu_custom_call.1} parent=1 // pred_check
      _
    $region3: #{tpu_custom_call.1} parent=1 // pred_check_branch
      %11 = sbr.rel (0) target = $region5
    $region4: #{tpu_custom_call.1} parent=1 // pred_region
      %13 = vsyncadd [#allocation3], 0
      %s15 = sshll.u32 %s0, 4
      %s16 = int_to_ptr.hbm [resolvable:$true] %s15
      %s17 = sshll.u32 [#allocation2], 4
      %s18 = int_to_ptr.vmem [resolvable:$true] %s17
      %20 = dma.hbm_to_vmem [thread:$0]  %s16, 64, %s18, [#allocation3]
    $region5: #{tpu_custom_call.1} parent=1 // pred_fallthru
      _
    // Predicated region
    $region6: #{tpu_custom_call.1} parent=1 // pred_check
      _
    $region7: #{tpu_custom_call.1} parent=1 // pred_check_branch
      %22 = sbr.rel (0) target = $region9
    $region8: #{tpu_custom_call.1} parent=1 // pred_region
      %24 = vsyncadd [#allocation6], 0
      %s26 = sshll.u32 %s1, 4
      %s27 = int_to_ptr.hbm [resolvable:$true] %s26
      %s28 = sshll.u32 [#allocation5], 4
      %s29 = int_to_ptr.vmem [resolvable:$true] %s28
      %31 = dma.hbm_to_vmem [thread:$0]  %s27, 64, %s29, [#allocation6]
    $region9: #{tpu_custom_call.1} parent=1 // pred_fallthru
      _
    // Predicated region
    $region10: #{tpu_custom_call.1} parent=1 // pred_check
      _
    $region11: #{tpu_custom_call.1} parent=1 // pred_check_branch
      %33 = sbr.rel (0) target = $region13
    $region12: #{tpu_custom_call.1} parent=1 // pred_region
      %35 = dma.done [#allocation3], 64
    $region13: #{tpu_custom_call.1} parent=1 // pred_fallthru
      _
    // Predicated region
    $region14: #{tpu_custom_call.1} parent=1 // pred_check
      _
    $region15: #{tpu_custom_call.1} parent=1 // pred_check_branch
      %37 = sbr.rel (0) target = $region17
    $region16: #{tpu_custom_call.1} parent=1 // pred_region
      %39 = dma.done [#allocation6], 64
    $region17: #{tpu_custom_call.1} parent=1 // pred_fallthru
      _
    %v40 = vld [vmem:[#allocation2] sm:$0xf]
    %v41 = vld [vmem:[#allocation5] sm:$0xf]
    %v42 = vsub.f32 %v40, %v41
    %v43 = vmul.f32 %v42, %v42
    %v44 = vlaneseq
    %v45 = vshrl.u32 %v44, 7
    %v46 = vadd.s32 %v45, 8
    %v47 = vadd.s32 %v45, 16
    %v48 = vadd.s32 %v45, 24
    %v49 = vadd.s32 %v45, 32
    %v50 = vadd.s32 %v45, 40
    %v51 = vadd.s32 %v45, 48
    %v52 = vadd.s32 %v45, 56
    %v53 = vadd.s32 %v45, 64
    %v54 = vadd.s32 %v45, 72
    %v55 = vadd.s32 %v45, 80
    %v56 = vadd.s32 %v45, 88
    %v57 = vadd.s32 %v45, 96
    %v58 = vadd.s32 %v45, 104
    %v59 = vadd.s32 %v45, 112
    %v60 = vadd.s32 %v45, 120
    %v61 = vlaneseq
    %v62 = vand.u32 %v61, 127
    %v63 = vmul.u32 %v62, 32
    %vm64 = vcmp.ge.s32.totalorder %v45, %v63
    %vm65 = vcmp.ge.s32.totalorder %v46, %v63
    %vm66 = vcmp.ge.s32.totalorder %v47, %v63
    %vm67 = vcmp.ge.s32.totalorder %v48, %v63
    %vm68 = vcmp.ge.s32.totalorder %v49, %v63
    %vm69 = vcmp.ge.s32.totalorder %v50, %v63
    %vm70 = vcmp.ge.s32.totalorder %v51, %v63
    %vm71 = vcmp.ge.s32.totalorder %v52, %v63
    %vm72 = vcmp.ge.s32.totalorder %v53, %v63
    %vm73 = vcmp.ge.s32.totalorder %v54, %v63
    %vm74 = vcmp.ge.s32.totalorder %v55, %v63
    %vm75 = vcmp.ge.s32.totalorder %v56, %v63
    %vm76 = vcmp.ge.s32.totalorder %v57, %v63
    %vm77 = vcmp.ge.s32.totalorder %v58, %v63
    %vm78 = vcmp.ge.s32.totalorder %v59, %v63
    %vm79 = vcmp.ge.s32.totalorder %v60, %v63
    %v80 = vadd.s32 %v62, 1
    %v81 = vmul.u32 %v80, 32
    %vm82 = vcmp.lt.s32.totalorder %v45, %v81
    %vm83 = vcmp.lt.s32.totalorder %v46, %v81
    %vm84 = vcmp.lt.s32.totalorder %v47, %v81
    %vm85 = vcmp.lt.s32.totalorder %v48, %v81
    %vm86 = vcmp.lt.s32.totalorder %v49, %v81
    %vm87 = vcmp.lt.s32.totalorder %v50, %v81
    %vm88 = vcmp.lt.s32.totalorder %v51, %v81
    %vm89 = vcmp.lt.s32.totalorder %v52, %v81
    %vm90 = vcmp.lt.s32.totalorder %v53, %v81
    %vm91 = vcmp.lt.s32.totalorder %v54, %v81
    %vm92 = vcmp.lt.s32.totalorder %v55, %v81
    %vm93 = vcmp.lt.s32.totalorder %v56, %v81
    %vm94 = vcmp.lt.s32.totalorder %v57, %v81
    %vm95 = vcmp.lt.s32.totalorder %v58, %v81
    %vm96 = vcmp.lt.s32.totalorder %v59, %v81
    %vm97 = vcmp.lt.s32.totalorder %v60, %v81
    %vm98 = vmand %vm64, %vm82
    %vm99 = vmand %vm65, %vm83
    %vm100 = vmand %vm66, %vm84
    %vm101 = vmand %vm67, %vm85
    %vm102 = vmand %vm68, %vm86
    %vm103 = vmand %vm69, %vm87
    %vm104 = vmand %vm70, %vm88
    %vm105 = vmand %vm71, %vm89
    %vm106 = vmand %vm72, %vm90
    %vm107 = vmand %vm73, %vm91
    %vm108 = vmand %vm74, %vm92
    %vm109 = vmand %vm75, %vm93
    %vm110 = vmand %vm76, %vm94
    %vm111 = vmand %vm77, %vm95
    %vm112 = vmand %vm78, %vm96
    %vm113 = vmand %vm79, %vm97
    %v114 = vsel %vm98, 1, 0
    %v115 = vsel %vm99, 1, 0
    %v116 = vsel %vm100, 1, 0
    %v117 = vsel %vm101, 1, 0
    %v118 = vsel %vm102, 1, 0
    %v119 = vsel %vm103, 1, 0
    %v120 = vsel %vm104, 1, 0
    %v121 = vsel %vm105, 1, 0
    %v122 = vsel %vm106, 1, 0
    %v123 = vsel %vm107, 1, 0
    %v124 = vsel %vm108, 1, 0
    %v125 = vsel %vm109, 1, 0
    %v126 = vsel %vm110, 1, 0
    %v127 = vsel %vm111, 1, 0
    %v128 = vsel %vm112, 1, 0
    %v129 = vsel %vm113, 1, 0
    %v130 = vcvt.s32.f32 %v114
    %v131 = vcvt.s32.f32 %v115
    %v132 = vcvt.s32.f32 %v116
    %v133 = vcvt.s32.f32 %v117
    %v134 = vcvt.s32.f32 %v118
    %v135 = vcvt.s32.f32 %v119
    %v136 = vcvt.s32.f32 %v120
    %v137 = vcvt.s32.f32 %v121
    %v138 = vcvt.s32.f32 %v122
    %v139 = vcvt.s32.f32 %v123
    %v140 = vcvt.s32.f32 %v124
    %v141 = vcvt.s32.f32 %v125
    %v142 = vcvt.s32.f32 %v126
    %v143 = vcvt.s32.f32 %v127
    %v144 = vcvt.s32.f32 %v128
    %v145 = vcvt.s32.f32 %v129
    %146 = vmatpush.msra.mxu0 %v145
    %147 = vmatpush.msra.mxu0 %v144
    %148 = vmatpush.msra.mxu0 %v143
    %149 = vmatpush.msra.mxu0 %v142
    %150 = vmatpush.msra.mxu0 %v141
    %151 = vmatpush.msra.mxu0 %v140
    %152 = vmatpush.msra.mxu0 %v139
    %153 = vmatpush.msra.mxu0 %v138
    %154 = vmatpush.msra.mxu0 %v137
    %155 = vmatpush.msra.mxu0 %v136
    %156 = vmatpush.msra.mxu0 %v135
    %157 = vmatpush.msra.mxu0 %v134
    %158 = vmatpush.msra.mxu0 %v133
    %159 = vmatpush.msra.mxu0 %v132
    %160 = vmatpush.msra.mxu0 %v131
    %161 = vmatpush.msra.mxu0 %v130
    %162 = vmatmul.f32.gmra.mxu0 %v43
    %v163 = vpop.f32.mrf.mxu0
    %v164 = vadd.f32 0.0, %v163
    %165 = vdwg.mxu0
    %v166 = vrsqrt.pop %v164
    %v167 = vmul.f32 %v166, %v164
    %v168 = vmul.f32 %v167, %v166
    %v169 = vmul.f32 0.5, %v168
    %v170 = vsub.f32 1.5, %v169
    %v171 = vmul.f32 %v166, %v170
    %v172 = vmul.f32 %v164, %v171
    %vm173 = vcmp.eq.f32.partialorder %v164, inf
    %v174 = vsel %vm173, %v164, %v172
    %vm175 = vcmp.eq.f32.partialorder %v164, 0.0
    %v176 = vand.u32 %v164, 2147483648
    %v177 = vsel %vm175, %v176, %v174
    %v178 = vmul.f32 %v177, 0.5
    %v179 = vtanh.pop %v178
    %v180 = vmul.f32 %v179, 0.5
    %v181 = vadd.f32 %v180, 0.5
    %vm182 = vcmask 27648
    %183 = vst.msk [vmem:[#allocation7] sm:$0xf] %vm182, %v181
    // Predicated region
    $region18: #{tpu_custom_call.1} parent=1 // pred_check
      _
    $region19: #{tpu_custom_call.1} parent=1 // pred_check_branch
      %185 = sbr.rel (0) target = $region21
    $region20: #{tpu_custom_call.1} parent=1 // pred_region
      %187 = vsyncadd [#allocation4], 0
      %s189 = sshll.u32 [#allocation7], 4
      %s190 = int_to_ptr.vmem [resolvable:$true] %s189
      %s191 = sshll.u32 %s2, 4
      %s192 = int_to_ptr.hbm [resolvable:$true] %s191
      %194 = dma.vmem_to_hbm [thread:$0]  %s190, 64, %s192, [#allocation4]
    $region21: #{tpu_custom_call.1} parent=1 // pred_fallthru
      _
    // Predicated region
    $region22: #{tpu_custom_call.1} parent=1 // pred_check
      _
    $region23: #{tpu_custom_call.1} parent=1 // pred_check_branch
      %196 = sbr.rel (0) target = $region25
    $region24: #{tpu_custom_call.1} parent=1 // pred_region
      %198 = dma.done [#allocation4], 64
    $region25: #{tpu_custom_call.1} parent=1 // pred_fallthru
      _
    %199 = vsyncpa [#allocation3], 1
    %200 = vsyncpa [#allocation6], 1
    %201 = vsyncpa [#allocation4], 1

</llo_original>
